<compile_context>
chip_gen: v7x
topology: tpu7x:2x2x1
jax: 0.10.0
libtpu: 0.0.40
codegen_flags: <defaults>
</compile_context>

<pallas_src>
import math
from functools import partial

import jax
import jax.numpy as jnp
from jax.experimental import pallas as pl
from jax.experimental.pallas import tpu as pltpu

TWO_PI = 2.0 * math.pi

# Row layout of the packed (24, N) slab:
#   rows  0..7  : predictions [x2d, y2d, x3d, y3d, z3d, theta, phi, conf2d]
#   rows  8..15 : targets     [x2d, y2d, x3d, y3d, z3d, theta, phi, vis2d ]
#   rows 16..23 : weights     [vis2d, vis2d, vis3d, vis3d, vis3d, vis_o, vis_o, real_mask]
_ANGLE_ROW_A = 5
_ANGLE_ROW_B = 6


def _pedrec_loss_head_kernel(slab_ref, sigmas_ref, out_ref, *,
                             use_p3d_loss, use_orientation_loss, use_conf_loss):
    # Sublane-tile-aligned slices of the single lane-dense slab.
    preds = slab_ref[0:8, :].astype(jnp.float32)     # (8, N)
    tgts = slab_ref[8:16, :].astype(jnp.float32)     # (8, N)
    wts = slab_ref[16:24, :].astype(jnp.float32)     # (8, N)

    # Plain L1 per channel; circular L1 only for the two angle rows.
    raw = jnp.abs(preds - tgts)
    d = jnp.mod(raw, TWO_PI)
    circ = jnp.minimum(d, TWO_PI - d)
    row = jax.lax.broadcasted_iota(jnp.int32, raw.shape, 0)
    is_angle = (row == _ANGLE_ROW_A) | (row == _ANGLE_ROW_B)
    err = jnp.where(is_angle, circ, raw)

    # Two batched lane reductions instead of seven scalar ones.
    num = jnp.sum(err * wts, axis=-1, keepdims=True)   # (8, 1)
    den = jnp.sum(wts, axis=-1, keepdims=True)         # (8, 1)
    # Exact division: 0/0 -> NaN is load-bearing for the isnan gating below.
    ratio = num / den                                   # (8, 1)

    p2d_loss = ratio[0, 0] + ratio[1, 0]
    p3d_loss = ratio[2, 0] + ratio[3, 0] + ratio[4, 0]
    ori_loss = ratio[5, 0] + ratio[6, 0]
    conf_loss = ratio[7, 0]                             # unmasked mean (den = B*J)

    # ---- Uncertainty-weighted combination (exact forward logic) ----
    s0 = sigmas_ref[0]
    s1 = sigmas_ref[1]
    s2 = sigmas_ref[2]
    s3 = sigmas_ref[3]
    s0sq, s1sq, s2sq, s3sq = s0 * s0, s1 * s1, s2 * s2, s3 * s3

    loss = jnp.float32(0.0)
    sigma_prod = jnp.float32(1.0)

    v2d = jnp.logical_not(jnp.isnan(p2d_loss))
    loss = loss + jnp.where(v2d, (0.5 / s0sq) * p2d_loss, 0.0)
    sigma_prod = sigma_prod * jnp.where(v2d, s0sq, 1.0)

    if use_p3d_loss:
        v3d = jnp.logical_not(jnp.isnan(p3d_loss))
        loss = loss + jnp.where(v3d, (0.5 / s1sq) * p3d_loss, 0.0)
        sigma_prod = sigma_prod * jnp.where(v3d, s1sq, 1.0)

    if use_orientation_loss:
        vor = jnp.logical_not(jnp.isnan(ori_loss))
        loss = loss + jnp.where(vor, (0.5 / s2sq) * ori_loss, 0.0)
        sigma_prod = sigma_prod * jnp.where(vor, s2sq, 1.0)

    if use_conf_loss:
        vcf = jnp.logical_not(jnp.isnan(conf_loss))
        loss = loss + jnp.where(vcf, (1.0 / s3sq) * conf_loss, 0.0)
        sigma_prod = sigma_prod * jnp.where(vcf, s3sq, 1.0)

    out_ref[0] = loss + jnp.log(1.0 + sigma_prod)


def _pack_slab(p2d_p, p2d_t, p3d_p, p3d_t, ori_p, ori_t):
    """Wrapper-side layout plumbing: one lane-dense (24, N) slab, native dtype."""
    B, J, _ = p2d_p.shape
    O = ori_p.shape[1]
    nj, no = B * J, B * O
    N = ((max(nj, no) + 127) // 128) * 128
    dt = jnp.result_type(p2d_p.dtype, p2d_t.dtype, p3d_p.dtype, p3d_t.dtype,
                         ori_p.dtype, ori_t.dtype)

    def plane(x):
        x = x.reshape(-1).astype(dt)
        return jnp.pad(x, (0, N - x.shape[0]))

    vis2d = p2d_t[:, :, 3]
    vis3d = p3d_t[:, :, 4]
    vis_o = ori_t[:, :, 2]
    real_mask = jnp.ones((nj,), dt)   # denominator for the unmasked conf mean

    rows = [
        # predictions (rows 0..7)
        plane(p2d_p[:, :, 0]), plane(p2d_p[:, :, 1]),
        plane(p3d_p[:, :, 0]), plane(p3d_p[:, :, 1]), plane(p3d_p[:, :, 2]),
        plane(ori_p[:, :, 0]), plane(ori_p[:, :, 1]),
        plane(p2d_p[:, :, 2]),
        # targets (rows 8..15)
        plane(p2d_t[:, :, 0]), plane(p2d_t[:, :, 1]),
        plane(p3d_t[:, :, 0]), plane(p3d_t[:, :, 1]), plane(p3d_t[:, :, 2]),
        plane(ori_t[:, :, 0]), plane(ori_t[:, :, 1]),
        plane(vis2d),
        # weights (rows 16..23)
        plane(vis2d), plane(vis2d),
        plane(vis3d), plane(vis3d), plane(vis3d),
        plane(vis_o), plane(vis_o),
        plane(real_mask),
    ]
    return jnp.stack(rows, axis=0)   # (24, N)


def pedrec_loss_head(outputs, targets, sigmas,
                     use_p3d_loss=True, use_orientation_loss=True, use_conf_loss=True):
    """Pallas wrapper mirroring PedRecNetLossHead.forward."""
    pose_2d_preds, pose_3d_preds, orientation_preds = outputs[0:3]
    pose_2d_targets = targets['skeleton']
    pose_3d_targets = targets['skeleton_3d']
    orientation_targets = targets['orientation']

    slab = _pack_slab(pose_2d_preds, pose_2d_targets,
                      pose_3d_preds, pose_3d_targets,
                      orientation_preds, orientation_targets)

    kernel = partial(_pedrec_loss_head_kernel,
                     use_p3d_loss=use_p3d_loss,
                     use_orientation_loss=use_orientation_loss,
                     use_conf_loss=use_conf_loss)

    out = pl.pallas_call(
        kernel,
        out_shape=jax.ShapeDtypeStruct((1,), jnp.float32),
        in_specs=[pl.BlockSpec(memory_space=pltpu.MemorySpace.VMEM),
                  pl.BlockSpec(memory_space=pltpu.MemorySpace.SMEM)],
        out_specs=pl.BlockSpec(memory_space=pltpu.MemorySpace.SMEM),
    )(slab, sigmas.astype(jnp.float32))
    return out[0]


def _reference_loss(outputs, targets, sigmas,
                    use_p3d_loss=True, use_orientation_loss=True, use_conf_loss=True):
    """Pure-JAX reference of the same math (numerical sanity check)."""
    p2d_p, p3d_p, ori_p = outputs[0:3]
    p2d_t, p3d_t, ori_t = targets['skeleton'], targets['skeleton_3d'], targets['orientation']

    vis2d = p2d_t[:, :, 3]
    p2d_loss = (jnp.abs(p2d_p[:, :, :2] - p2d_t[:, :, :2]).sum(-1) * vis2d).sum() / vis2d.sum()
    vis3d = p3d_t[:, :, 4]
    p3d_loss = (jnp.abs(p3d_p[:, :, :3] - p3d_t[:, :, :3]).sum(-1) * vis3d).sum() / vis3d.sum()
    vis_o = ori_t[:, :, 2]
    d = jnp.mod(jnp.abs(ori_p - ori_t[:, :, :2]), TWO_PI)
    ori_loss = (jnp.minimum(d, TWO_PI - d).sum(-1) * vis_o).sum() / vis_o.sum()
    conf_loss = jnp.abs(p2d_p[:, :, 2] - vis2d).mean()

    ssq = sigmas ** 2
    loss, sp = jnp.float32(0.0), jnp.float32(1.0)
    v = ~jnp.isnan(p2d_loss)
    loss += jnp.where(v, p2d_loss / (2 * ssq[0]), 0.0); sp *= jnp.where(v, ssq[0], 1.0)
    if use_p3d_loss:
        v = ~jnp.isnan(p3d_loss)
        loss += jnp.where(v, p3d_loss / (2 * ssq[1]), 0.0); sp *= jnp.where(v, ssq[1], 1.0)
    if use_orientation_loss:
        v = ~jnp.isnan(ori_loss)
        loss += jnp.where(v, ori_loss / (2 * ssq[2]), 0.0); sp *= jnp.where(v, ssq[2], 1.0)
    if use_conf_loss:
        v = ~jnp.isnan(conf_loss)
        loss += jnp.where(v, conf_loss / ssq[3], 0.0); sp *= jnp.where(v, ssq[3], 1.0)
    return loss + jnp.log(1.0 + sp)


if __name__ == "__main__":
    B, J, O = 2, 16, 2
    key = jax.random.PRNGKey(0)
    ks = jax.random.split(key, 8)

    pose_2d_preds = jax.random.uniform(ks[0], (B, J, 3), jnp.float32)
    pose_3d_preds = jax.random.normal(ks[1], (B, J, 4), jnp.float32)
    orientation_preds = jax.random.uniform(ks[2], (B, O, 2), jnp.float32) * TWO_PI

    vis2d = (jax.random.uniform(ks[3], (B, J)) > 0.3).astype(jnp.float32)
    vis3d = (jax.random.uniform(ks[4], (B, J)) > 0.3).astype(jnp.float32)
    vis_o = jnp.ones((B, O), jnp.float32)

    pose_2d_targets = jnp.concatenate(
        [jax.random.uniform(ks[5], (B, J, 2), jnp.float32),
         jnp.ones((B, J, 1), jnp.float32), vis2d[..., None]], axis=-1)     # (B, J, 4)
    pose_3d_targets = jnp.concatenate(
        [jax.random.normal(ks[6], (B, J, 3), jnp.float32),
         jnp.ones((B, J, 1), jnp.float32), vis3d[..., None]], axis=-1)     # (B, J, 5)
    orientation_targets = jnp.concatenate(
        [jax.random.uniform(ks[7], (B, O, 2), jnp.float32) * TWO_PI,
         vis_o[..., None]], axis=-1)                                       # (B, O, 3)

    # nn.Parameter(torch.ones(4)) — deterministic init, as in the module.
    sigmas = jnp.ones((4,), jnp.float32)

    outputs = (pose_2d_preds, pose_3d_preds, orientation_preds)
    targets = {'skeleton': pose_2d_targets,
               'skeleton_3d': pose_3d_targets,
               'orientation': orientation_targets}

    loss = pedrec_loss_head(outputs, targets, sigmas)
    loss = jax.block_until_ready(loss)

    ref = _reference_loss(outputs, targets, sigmas)
    assert jnp.allclose(loss, ref, rtol=1e-5, atol=1e-5), (loss, ref)

    print("KERNEL_OK")
</pallas_src>

<mosaic_0001>
module attributes {stable_mosaic.version = 11 : i64} {
  func.func @_pedrec_loss_head_kernel(%arg0: memref<24x128xf32, #tpu.memory_space<vmem>>, %arg1: memref<4xf32, #tpu.memory_space<smem>>, %arg2: memref<1xf32, #tpu.memory_space<smem>>) attributes {dimension_semantics = [], scalar_prefetch = 0 : i64, scratch_operands = 0 : i64, tpu.core_type = #tpu.core_type<tc>} {
    %c0 = arith.constant 0 : index
    %c0_0 = arith.constant 0 : index
    %0 = vector.load %arg0[%c0, %c0_0] : memref<24x128xf32, #tpu.memory_space<vmem>>, vector<8x128xf32>
    %c8 = arith.constant 8 : index
    %c0_1 = arith.constant 0 : index
    %1 = vector.load %arg0[%c8, %c0_1] : memref<24x128xf32, #tpu.memory_space<vmem>>, vector<8x128xf32>
    %c16 = arith.constant 16 : index
    %c0_2 = arith.constant 0 : index
    %2 = vector.load %arg0[%c16, %c0_2] : memref<24x128xf32, #tpu.memory_space<vmem>>, vector<8x128xf32>
    %3 = arith.subf %0, %1 : vector<8x128xf32>
    %4 = math.absf %3 : vector<8x128xf32>
    %cst = arith.constant 6.28318548 : f32
    %5 = vector.broadcast %cst : f32 to vector<8x128xf32>
    %6 = arith.remf %4, %5 : vector<8x128xf32>
    %cst_3 = arith.constant 0.000000e+00 : f32
    %7 = vector.broadcast %cst_3 : f32 to vector<8x128xf32>
    %8 = arith.cmpf one, %6, %7 : vector<8x128xf32>
    %cst_4 = arith.constant 0.000000e+00 : f32
    %9 = vector.broadcast %cst_4 : f32 to vector<8x128xf32>
    %10 = arith.cmpf olt, %6, %9 : vector<8x128xf32>
    %cst_5 = arith.constant 0.000000e+00 : f32
    %11 = arith.cmpf olt, %cst, %cst_5 : f32
    %12 = vector.broadcast %11 : i1 to vector<8x128xi1>
    %13 = vector.broadcast %12 : vector<8x128xi1> to vector<8x128xi1>
    %14 = arith.xori %10, %13 : vector<8x128xi1>
    %15 = arith.andi %14, %8 : vector<8x128xi1>
    %16 = vector.broadcast %cst : f32 to vector<8x128xf32>
    %17 = arith.addf %6, %16 : vector<8x128xf32>
    %18 = arith.select %15, %17, %6 : vector<8x128xi1>, vector<8x128xf32>
    %cst_6 = arith.constant 6.28318548 : f32
    %19 = vector.broadcast %cst_6 : f32 to vector<8x128xf32>
    %20 = arith.subf %19, %18 : vector<8x128xf32>
    %21 = arith.minimumf %18, %20 : vector<8x128xf32>
    %22 = tpu.iota {dimensions = array<i32: 0>} : vector<8x128xi32>
    %c5_i32 = arith.constant 5 : i32
    %23 = vector.broadcast %c5_i32 : i32 to vector<8x128xi32>
    %24 = arith.cmpi eq, %22, %23 : vector<8x128xi32>
    %c6_i32 = arith.constant 6 : i32
    %25 = vector.broadcast %c6_i32 : i32 to vector<8x128xi32>
    %26 = arith.cmpi eq, %22, %25 : vector<8x128xi32>
    %27 = arith.ori %24, %26 : vector<8x128xi1>
    %28 = arith.select %27, %21, %4 : vector<8x128xi1>, vector<8x128xf32>
    %29 = arith.mulf %28, %2 : vector<8x128xf32>
    %cst_7 = arith.constant dense<0.000000e+00> : vector<8xf32>
    %30 = vector.multi_reduction <add>, %29, %cst_7 [1] : vector<8x128xf32> to vector<8xf32>
    %31 = vector.shape_cast %30 : vector<8xf32> to vector<8x1xf32>
    %cst_8 = arith.constant dense<0.000000e+00> : vector<8xf32>
    %32 = vector.multi_reduction <add>, %2, %cst_8 [1] : vector<8x128xf32> to vector<8xf32>
    %33 = vector.shape_cast %32 : vector<8xf32> to vector<8x1xf32>
    %34 = arith.divf %31, %33 : vector<8x1xf32>
    %35 = vector.extract_strided_slice %34 {offsets = [0, 0], sizes = [1, 1], strides = [1, 1]} : vector<8x1xf32> to vector<1x1xf32>
    %36 = vector.extract %35[0, 0] : f32 from vector<1x1xf32>
    %37 = vector.extract_strided_slice %34 {offsets = [1, 0], sizes = [1, 1], strides = [1, 1]} : vector<8x1xf32> to vector<1x1xf32>
    %38 = vector.extract %37[0, 0] : f32 from vector<1x1xf32>
    %39 = arith.addf %36, %38 : f32
    %40 = vector.extract_strided_slice %34 {offsets = [2, 0], sizes = [1, 1], strides = [1, 1]} : vector<8x1xf32> to vector<1x1xf32>
    %41 = vector.extract %40[0, 0] : f32 from vector<1x1xf32>
    %42 = vector.extract_strided_slice %34 {offsets = [3, 0], sizes = [1, 1], strides = [1, 1]} : vector<8x1xf32> to vector<1x1xf32>
    %43 = vector.extract %42[0, 0] : f32 from vector<1x1xf32>
    %44 = arith.addf %41, %43 : f32
    %45 = vector.extract_strided_slice %34 {offsets = [4, 0], sizes = [1, 1], strides = [1, 1]} : vector<8x1xf32> to vector<1x1xf32>
    %46 = vector.extract %45[0, 0] : f32 from vector<1x1xf32>
    %47 = arith.addf %44, %46 : f32
    %48 = vector.extract_strided_slice %34 {offsets = [5, 0], sizes = [1, 1], strides = [1, 1]} : vector<8x1xf32> to vector<1x1xf32>
    %49 = vector.extract %48[0, 0] : f32 from vector<1x1xf32>
    %50 = vector.extract_strided_slice %34 {offsets = [6, 0], sizes = [1, 1], strides = [1, 1]} : vector<8x1xf32> to vector<1x1xf32>
    %51 = vector.extract %50[0, 0] : f32 from vector<1x1xf32>
    %52 = arith.addf %49, %51 : f32
    %53 = vector.extract_strided_slice %34 {offsets = [7, 0], sizes = [1, 1], strides = [1, 1]} : vector<8x1xf32> to vector<1x1xf32>
    %54 = vector.extract %53[0, 0] : f32 from vector<1x1xf32>
    %c0_9 = arith.constant 0 : index
    %55 = memref.load %arg1[%c0_9] : memref<4xf32, #tpu.memory_space<smem>>
    %c1 = arith.constant 1 : index
    %56 = memref.load %arg1[%c1] : memref<4xf32, #tpu.memory_space<smem>>
    %c2 = arith.constant 2 : index
    %57 = memref.load %arg1[%c2] : memref<4xf32, #tpu.memory_space<smem>>
    %c3 = arith.constant 3 : index
    %58 = memref.load %arg1[%c3] : memref<4xf32, #tpu.memory_space<smem>>
    %59 = arith.mulf %55, %55 : f32
    %60 = arith.mulf %56, %56 : f32
    %61 = arith.mulf %57, %57 : f32
    %62 = arith.mulf %58, %58 : f32
    %63 = arith.cmpf one, %39, %39 : f32
    %true = arith.constant true
    %64 = arith.xori %63, %true : i1
    %cst_10 = arith.constant 5.000000e-01 : f32
    %65 = arith.divf %cst_10, %59 : f32
    %66 = arith.mulf %65, %39 : f32
    %cst_11 = arith.constant 0.000000e+00 : f32
    %67 = arith.select %64, %66, %cst_11 : f32
    %cst_12 = arith.constant 0.000000e+00 : f32
    %68 = arith.addf %cst_12, %67 : f32
    %cst_13 = arith.constant 1.000000e+00 : f32
    %69 = arith.select %64, %59, %cst_13 : f32
    %cst_14 = arith.constant 1.000000e+00 : f32
    %70 = arith.mulf %cst_14, %69 : f32
    %71 = arith.cmpf one, %47, %47 : f32
    %true_15 = arith.constant true
    %72 = arith.xori %71, %true_15 : i1
    %cst_16 = arith.constant 5.000000e-01 : f32
    %73 = arith.divf %cst_16, %60 : f32
    %74 = arith.mulf %73, %47 : f32
    %cst_17 = arith.constant 0.000000e+00 : f32
    %75 = arith.select %72, %74, %cst_17 : f32
    %76 = arith.addf %68, %75 : f32
    %cst_18 = arith.constant 1.000000e+00 : f32
    %77 = arith.select %72, %60, %cst_18 : f32
    %78 = arith.mulf %70, %77 : f32
    %79 = arith.cmpf one, %52, %52 : f32
    %true_19 = arith.constant true
    %80 = arith.xori %79, %true_19 : i1
    %cst_20 = arith.constant 5.000000e-01 : f32
    %81 = arith.divf %cst_20, %61 : f32
    %82 = arith.mulf %81, %52 : f32
    %cst_21 = arith.constant 0.000000e+00 : f32
    %83 = arith.select %80, %82, %cst_21 : f32
    %84 = arith.addf %76, %83 : f32
    %cst_22 = arith.constant 1.000000e+00 : f32
    %85 = arith.select %80, %61, %cst_22 : f32
    %86 = arith.mulf %78, %85 : f32
    %87 = arith.cmpf one, %54, %54 : f32
    %true_23 = arith.constant true
    %88 = arith.xori %87, %true_23 : i1
    %cst_24 = arith.constant 1.000000e+00 : f32
    %89 = arith.divf %cst_24, %62 : f32
    %90 = arith.mulf %89, %54 : f32
    %cst_25 = arith.constant 0.000000e+00 : f32
    %91 = arith.select %88, %90, %cst_25 : f32
    %92 = arith.addf %84, %91 : f32
    %cst_26 = arith.constant 1.000000e+00 : f32
    %93 = arith.select %88, %62, %cst_26 : f32
    %94 = arith.mulf %86, %93 : f32
    %cst_27 = arith.constant 1.000000e+00 : f32
    %95 = arith.addf %cst_27, %94 : f32
    %96 = math.log %95 : f32
    %97 = arith.addf %92, %96 : f32
    %c0_28 = arith.constant 0 : index
    %98 = memref.load %arg2[%c0_28] : memref<1xf32, #tpu.memory_space<smem>>
    memref.store %97, %arg2[%c0_28] : memref<1xf32, #tpu.memory_space<smem>>
    return
  }
}

</mosaic_0001>

<llo_original>
// kernel: tpu_custom_call.1
$region0: #{tpu_custom_call.1}
  #allocation0 [shape = 'u32[]', space=smem, size = 0x4, offset = 0x4, fixed_abs, tag = 'smem constant byte address 0x4 - core index']
  #allocation1 [shape = 'u32[144,128]{1,0:T(1,128)}', space=vmem, size = 0x12000, scoped, tag = 'internal scratch']
  %s0 = inlined_call_operand.hbm [shape: f32[24,128], index: 0, kind: input, shape index: {}]
  %s1 = inlined_call_operand.vmem [shape: f32[4], index: 1, kind: input, shape index: {}]
  %s2 = inlined_call_operand.hbm [shape: f32[1], index: 2, kind: output, shape index: {}]
  %s3 = sld [smem:[#allocation0]]
  $region26: #{tpu_custom_call.1} parent=0
    _
  %s5 = ssub.s32 1, %s3
  %s6 = scalar_select 0, %s5, %s3
  $region1: #{tpu_custom_call.1} parent=0
    #allocation2 [shape = 'u8[12288]{0}', space=vmem, size = 0x3000, scoped, tag = 'input window, operand 0, single buffered']
    #allocation3 [shape = 's32[1]{0}', space=sflag, size = 0x4, scoped, tag = 'scoped memory for tpu_custom_call.1']
    #allocation4 [shape = 's32[1]{0}', space=sflag, size = 0x4, scoped, tag = 'scoped memory for tpu_custom_call.1']
    #allocation5 [shape = 's32[1]{0}', space=sflag, size = 0x4, scoped, tag = 'scoped memory for tpu_custom_call.1']
    #allocation6 [shape = 'u8[512]{0}', space=smem, size = 0x200, scoped, tag = 'input window, operand 1, single buffered']
    #allocation7 [shape = 'u8[512]{0}', space=smem, size = 0x200, scoped, tag = 'output window, operand 0, single buffered']
    %7 = vsyncpa [#allocation3], 0
    %8 = vsyncpa [#allocation5], 0
    %9 = vsyncpa [#allocation4], 0
    // Predicated region
    $region2: #{tpu_custom_call.1} parent=1 // pred_check
      _
    $region3: #{tpu_custom_call.1} parent=1 // pred_check_branch
      %11 = sbr.rel (0) target = $region5
    $region4: #{tpu_custom_call.1} parent=1 // pred_region
      %s13 = ssub.s32 384, 384
      %14 = vsyncadd [#allocation3], %s13
      %s15 = sshll.u32 [#allocation2], 4
      %s16 = int_to_ptr.vmem [resolvable:$true] %s15
      %21 = dma.hbm_to_vmem [thread:$0]  %s0, 384, %s16, [#allocation3], 128, 128, 8
    $region5: #{tpu_custom_call.1} parent=1 // pred_fallthru
      _
    // Predicated region
    $region6: #{tpu_custom_call.1} parent=1 // pred_check
      _
    $region7: #{tpu_custom_call.1} parent=1 // pred_check_branch
      %23 = sbr.rel (0) target = $region9
    $region8: #{tpu_custom_call.1} parent=1 // pred_region
      %s25 = ssub.s32 16, 16
      %26 = vsyncadd [#allocation5], %s25
      %s28 = sshll.u32 %s1, 4
      %s29 = int_to_ptr.vmem [resolvable:$true] %s28
      %31 = dma.vmem_to_smem %s29, 16, [#allocation6], [#allocation5]
    $region9: #{tpu_custom_call.1} parent=1 // pred_fallthru
      _
    // Predicated region
    $region10: #{tpu_custom_call.1} parent=1 // pred_check
      _
    $region11: #{tpu_custom_call.1} parent=1 // pred_check_branch
      %33 = sbr.rel (0) target = $region13
    $region12: #{tpu_custom_call.1} parent=1 // pred_region
      %34 = dma.done [#allocation3], 384
    $region13: #{tpu_custom_call.1} parent=1 // pred_fallthru
      _
    // Predicated region
    $region14: #{tpu_custom_call.1} parent=1 // pred_check
      _
    $region15: #{tpu_custom_call.1} parent=1 // pred_check_branch
      %36 = sbr.rel (0) target = $region17
    $region16: #{tpu_custom_call.1} parent=1 // pred_region
      %37 = dma.done [#allocation5], 16
    $region17: #{tpu_custom_call.1} parent=1 // pred_fallthru
      _
    %38 = sfence
    %v39 = vld [vmem:[#allocation2] sm:$0xff]
    %v40 = vld [vmem:[#allocation2 + $0x8] sm:$0xff]
    %v41 = vld [vmem:[#allocation2 + $0x10] sm:$0xff]
    %v42 = vsub.f32 %v39, %v40
    %v43 = vand.u32 2147483647, %v42
    %v44 = vand.u32 2147483647, %v43
    %v45 = vrcp.pop 6.2831855
    %v46 = vmul.f32 %v44, %v45
    %v47 = vfloor.f32 %v46
    %v48 = vmul.f32 %v47, 6.2831855
    %v49 = vsub.f32 %v44, %v48
    %vm50 = vcmp.eq.f32.partialorder %v49, 6.2831855
    %v51 = vsel %vm50, 0.0, %v49
    %v52 = vand.u32 2147483647, %v51
    %v53 = vand.u32 %v43, 2147483648
    %v54 = vor.u32 %v52, %v53
    %vm55 = vcmp.ne.f32.partialorder %v54, 0.0
    %vm56 = vcmp.lt.f32.partialorder %v54, 0.0
    %vm57 = vmand %vm56, %vm55
    %v58 = vadd.f32 %v54, 6.2831855
    %v59 = vsel %vm57, %v58, %v54
    %v60 = vsub.f32 6.2831855, %v59
    %v61 = vmin.f32 %v59, %v60
    %v62 = vlaneseq
    %v63 = vshrl.u32 %v62, 7
    %vm64 = vcmp.eq.s32.totalorder %v63, 5
    %vm65 = vcmp.eq.s32.totalorder %v63, 6
    %vm66 = vmor %vm64, %vm65
    %v67 = vsel %vm66, %v61, %v43
    %v68 = vmul.f32 %v67, %v41
    %69 = vadd.xlane.f32.xlu0 %v68
    %v70 = vpop.xlane.xlu0 %69
    %71 = vadd.xlane.f32.xlu0 %v41
    %v72 = vpop.xlane.xlu0 %71
    %v73 = vrcp.pop %v72
    %v74 = vmul.f32 %v70, %v73
    %s75 = vtos %v74
    %v76 = vrot.slane %v74, 1
    %s77 = vtos %v76
    %s78 = sadd.f32 %s75, %s77
    %v79 = vrot.slane %v74, 2
    %s80 = vtos %v79
    %v81 = vrot.slane %v74, 3
    %s82 = vtos %v81
    %s83 = sadd.f32 %s80, %s82
    %v84 = vrot.slane %v74, 4
    %s85 = vtos %v84
    %s86 = sadd.f32 %s83, %s85
    %v87 = vrot.slane %v74, 5
    %s88 = vtos %v87
    %v89 = vrot.slane %v74, 6
    %s90 = vtos %v89
    %s91 = sadd.f32 %s88, %s90
    %v92 = vrot.slane %v74, 7
    %s93 = vtos %v92
    %s94 = sld [smem:[#allocation6]]
    %s95 = sld [smem:[#allocation6 + $0x1]]
    %s96 = sld [smem:[#allocation6 + $0x2]]
    %s97 = sld [smem:[#allocation6 + $0x3]]
    %s98 = smul.f32 %s94, %s94
    %s99 = smul.f32 %s95, %s95
    %s100 = smul.f32 %s96, %s96
    %s101 = smul.f32 %s97, %s97
    %p102 = scmp.ne.f32.partialorder %s78, %s78
    %v103 = vstv %s98
    %v104 = vrcp.pop %v103
    %s105 = vtos %v104
    %s106 = smul.f32 0.5, %s105
    %s107 = smul.f32 %s106, %s78
    %s108 = scalar_select %p102, 0.0, %s107
    %s109 = sadd.f32 %s108, 0.0
    %s110 = scalar_select %p102, 1.0, %s98
    %p111 = scmp.ne.f32.partialorder %s86, %s86
    %v112 = vstv %s99
    %v113 = vrcp.pop %v112
    %s114 = vtos %v113
    %s115 = smul.f32 0.5, %s114
    %s116 = smul.f32 %s115, %s86
    %s117 = scalar_select %p111, 0.0, %s116
    %s118 = sadd.f32 %s109, %s117
    %s119 = scalar_select %p111, 1.0, %s99
    %s120 = smul.f32 %s110, %s119
    %p121 = scmp.ne.f32.partialorder %s91, %s91
    %v122 = vstv %s100
    %v123 = vrcp.pop %v122
    %s124 = vtos %v123
    %s125 = smul.f32 0.5, %s124
    %s126 = smul.f32 %s125, %s91
    %s127 = scalar_select %p121, 0.0, %s126
    %s128 = sadd.f32 %s118, %s127
    %s129 = scalar_select %p121, 1.0, %s100
    %s130 = smul.f32 %s120, %s129
    %p131 = scmp.ne.f32.partialorder %s93, %s93
    %v132 = vstv %s101
    %v133 = vrcp.pop %v132
    %s134 = vtos %v133
    %s135 = smul.f32 %s134, %s93
    %s136 = scalar_select %p131, 0.0, %s135
    %s137 = sadd.f32 %s128, %s136
    %s138 = scalar_select %p131, 1.0, %s101
    %s139 = smul.f32 %s130, %s138
    %s140 = sadd.f32 %s139, 1.0
    %v141 = vstv %s140
    %v142 = vlog2.pop %v141
    %v143 = vmul.f32 %v142, 0.6931472
    %s144 = vtos %v143
    %s145 = sadd.f32 %s137, %s144
    %s146 = scalar_lea.smem [#allocation7], 0
    %147 = sst [smem:[%s146]] %s145
    // Predicated region
    $region18: #{tpu_custom_call.1} parent=1 // pred_check
      _
    $region19: #{tpu_custom_call.1} parent=1 // pred_check_branch
      %149 = sbr.rel (0) target = $region21
    $region20: #{tpu_custom_call.1} parent=1 // pred_region
      %s151 = ssub.s32 16, 16
      %152 = vsyncadd [#allocation4], %s151
      %155 = dma.smem_to_hbm [#allocation7], 16, %s2, [#allocation4]
    $region21: #{tpu_custom_call.1} parent=1 // pred_fallthru
      _
    // Predicated region
    $region22: #{tpu_custom_call.1} parent=1 // pred_check
      _
    $region23: #{tpu_custom_call.1} parent=1 // pred_check_branch
      %157 = sbr.rel (0) target = $region25
    $region24: #{tpu_custom_call.1} parent=1 // pred_region
      %158 = dma.done [#allocation4], 16
    $region25: #{tpu_custom_call.1} parent=1 // pred_fallthru
      _
    %159 = sfence
    %160 = vsyncpa [#allocation3], 1
    %161 = vsyncpa [#allocation4], 1
    %162 = vsyncpa [#allocation5], 1

</llo_original>
